<compile_context>
chip_gen: v5e
topology: v5e:2x2
jax: 0.10.0
libtpu: 0.0.40
codegen_flags: <defaults>
</compile_context>

<pallas_src>
import functools

import jax
import jax.numpy as jnp
from jax.experimental import pallas as pl
from jax.experimental.pallas import tpu as pltpu

BN_EPS = 1e-5
VMEM_LIMIT = 32 * 1024 * 1024     # safe scoped-VMEM budget on v5e/v6e/v7x


# --------------------------------------------------------------------------
# Pallas kernels
# --------------------------------------------------------------------------

def _conv_matmul_kernel(*refs, relu, has_residual):
    """Fused im2col conv: bf16 MXU matmul (f32 accum) + bias (+res) (+ReLU)."""
    if has_residual:
        x_ref, w_ref, b_ref, r_ref, o_ref = refs
    else:
        x_ref, w_ref, b_ref, o_ref = refs
        r_ref = None
    acc = jnp.dot(x_ref[0], w_ref[...], preferred_element_type=jnp.float32)
    acc = acc + b_ref[...]
    if r_ref is not None:
        acc = acc + r_ref[0]
    if relu:
        acc = jnp.maximum(acc, 0.0)
    o_ref[0] = acc                          # direct block write, no concat


def _maxpool_kernel(x_ref, o_ref, *, taps, ho):
    """Max over `taps` pre-shifted windows stacked along the row axis."""
    m = x_ref[0, 0:ho]
    for t in range(1, taps):
        m = jnp.maximum(m, x_ref[0, t * ho:(t + 1) * ho])
    o_ref[0] = m


def _head_kernel(x_ref, w1_ref, b1_ref, w2_ref, b2_ref, w3_ref, b3_ref, o_ref):
    """Global average pool + fc1/ReLU + fc2/ReLU + fc3 (bf16 MXU, f32 accum)."""
    x = jnp.mean(x_ref[...], axis=1)                         # (N, 512) f32
    h = jnp.dot(x.astype(jnp.bfloat16), w1_ref[...],
                preferred_element_type=jnp.float32) + b1_ref[...]
    h = jnp.maximum(h, 0.0)
    h = jnp.dot(h.astype(jnp.bfloat16), w2_ref[...],
                preferred_element_type=jnp.float32) + b2_ref[...]
    h = jnp.maximum(h, 0.0)
    o_ref[...] = jnp.dot(h.astype(jnp.bfloat16), w3_ref[...],
                         preferred_element_type=jnp.float32) + b3_ref[...]


# --------------------------------------------------------------------------
# Wrappers (layout prep in XLA, math in Pallas)
# --------------------------------------------------------------------------

def _im2col(x, k, stride, pad, pad_value=0.0):
    """(N,H,W,C) -> (N,Ho,Wo,k*k*C) with tap-major (ky, kx, c) ordering."""
    _, h, w, _ = x.shape
    ho = (h + 2 * pad - k) // stride + 1
    wo = (w + 2 * pad - k) // stride + 1
    xp = jnp.pad(x, ((0, 0), (pad, pad), (pad, pad), (0, 0)),
                 constant_values=pad_value) if pad else x
    cols = []
    for ky in range(k):
        for kx in range(k):
            cols.append(xp[:, ky:ky + stride * (ho - 1) + 1:stride,
                           kx:kx + stride * (wo - 1) + 1:stride, :])
    col = cols[0] if len(cols) == 1 else jnp.concatenate(cols, axis=-1)
    return col, ho, wo


def conv_bn_act(x, cp, relu=True, residual=None):
    """x: (N,H,W,Cin) f32 NHWC -> (N,Ho,Wo,Cout) f32 (BN folded into cp)."""
    n = x.shape[0]
    k, s, p = cp["k"], cp["stride"], cp["pad"]
    xcol, ho, wo = _im2col(x, k, s, p)
    kd = xcol.shape[-1]
    co = cp["w_col"].shape[1]
    m = ho * wo
    xcol = xcol.reshape(n, m, kd).astype(jnp.bfloat16)

    tm = 256 if (m % 256 == 0) else m           # bound accumulator live range
    grid = (n, m // tm)

    in_specs = [
        pl.BlockSpec((1, tm, kd), lambda b, i: (b, i, 0)),
        pl.BlockSpec((kd, co), lambda b, i: (0, 0)),
        pl.BlockSpec((1, co), lambda b, i: (0, 0)),
    ]
    args = [xcol, cp["w_col"], cp["b"]]
    if residual is not None:
        in_specs.append(pl.BlockSpec((1, tm, co), lambda b, i: (b, i, 0)))
        args.append(residual.reshape(n, m, co))

    kernel = functools.partial(_conv_matmul_kernel, relu=relu,
                               has_residual=(residual is not None))
    out = pl.pallas_call(
        kernel,
        out_shape=jax.ShapeDtypeStruct((n, m, co), jnp.float32),
        grid=grid,
        in_specs=in_specs,
        out_specs=pl.BlockSpec((1, tm, co), lambda b, i: (b, i, 0)),
        compiler_params=pltpu.CompilerParams(
            dimension_semantics=("parallel", "parallel"),
            vmem_limit_bytes=VMEM_LIMIT),
    )(*args)
    return out.reshape(n, ho, wo, co)


def maxpool_3x3_s2(x):
    """3x3 stride-2 pad-1 max pool, NHWC."""
    n, h, w, c = x.shape
    ho = (h + 2 - 3) // 2 + 1
    wo = (w + 2 - 3) // 2 + 1
    xp = jnp.pad(x, ((0, 0), (1, 1), (1, 1), (0, 0)),
                 constant_values=-jnp.inf)
    slabs = []
    for ky in range(3):
        for kx in range(3):
            slabs.append(xp[:, ky:ky + 2 * (ho - 1) + 1:2,
                            kx:kx + 2 * (wo - 1) + 1:2, :])
    xs = jnp.concatenate(slabs, axis=1)          # (N, 9*Ho, Wo, C)
    kernel = functools.partial(_maxpool_kernel, taps=9, ho=ho)
    return pl.pallas_call(
        kernel,
        out_shape=jax.ShapeDtypeStruct((n, ho, wo, c), jnp.float32),
        grid=(n,),
        in_specs=[pl.BlockSpec((1, 9 * ho, wo, c), lambda b: (b, 0, 0, 0))],
        out_specs=pl.BlockSpec((1, ho, wo, c), lambda b: (b, 0, 0, 0)),
        compiler_params=pltpu.CompilerParams(
            dimension_semantics=("parallel",),
            vmem_limit_bytes=VMEM_LIMIT),
    )(xs)


def head_forward(x, params):
    """Adaptive avg-pool (1,1) + fc1/ReLU + fc2/ReLU + fc3, fused."""
    n, hf, wf, c = x.shape
    xm = x.reshape(n, hf * wf, c)
    nc = params["fc3"]["b"].shape[1]
    return pl.pallas_call(
        _head_kernel,
        out_shape=jax.ShapeDtypeStruct((n, nc), jnp.float32),
        compiler_params=pltpu.CompilerParams(vmem_limit_bytes=VMEM_LIMIT),
    )(xm, params["fc1"]["w"], params["fc1"]["b"],
      params["fc2"]["w"], params["fc2"]["b"],
      params["fc3"]["w"], params["fc3"]["b"])


def resnet_forward(x_nchw, params):
    """NCHW input (PyTorch convention) -> (N, num_classes) logits."""
    x = jnp.transpose(x_nchw, (0, 2, 3, 1)).astype(jnp.float32)   # NHWC, once
    x = conv_bn_act(x, params["conv1"], relu=True)                # 7x7/s2 + BN + ReLU
    x = maxpool_3x3_s2(x)                                         # 3x3/s2 maxpool
    for blocks in params["layers"]:                               # layer1..4
        for blk in blocks:                                        # BasicBlock
            identity = x
            if "downsample" in blk:
                identity = conv_bn_act(x, blk["downsample"], relu=False)
            y = conv_bn_act(x, blk["conv1"], relu=True)
            x = conv_bn_act(y, blk["conv2"], relu=True, residual=identity)
    return head_forward(x, params)


# --------------------------------------------------------------------------
# Parameters (BatchNorm folded, weights in bf16, biases in f32)
# --------------------------------------------------------------------------

def _fold_bn(w, gamma, beta, mean, var):
    scale = gamma / jnp.sqrt(var + BN_EPS)
    return w * scale, beta - mean * scale


def _conv_bn_param(key, k, cin, cout, stride):
    kw, kg, kb, km, kv = jax.random.split(key, 5)
    w = jax.random.normal(kw, (k, k, cin, cout), jnp.float32) * (2.0 / (k * k * cin)) ** 0.5
    gamma = jax.random.uniform(kg, (cout,), jnp.float32, 0.5, 1.5)
    beta = jax.random.normal(kb, (cout,), jnp.float32) * 0.1
    mean = jax.random.normal(km, (cout,), jnp.float32) * 0.1
    var = jax.random.uniform(kv, (cout,), jnp.float32, 0.5, 1.5)
    wf, bf = _fold_bn(w, gamma, beta, mean, var)
    wf = wf.astype(jnp.bfloat16)
    return {
        "w_col": wf.reshape(k * k * cin, cout),       # (ky,kx,c)-major rows
        "w_hwio": wf,                                 # HWIO, for the reference
        "b": bf.reshape(1, cout).astype(jnp.float32),
        "k": k, "stride": stride, "pad": (k - 1) // 2,
    }


def _fc_param(key, fin, fout):
    kw, kb = jax.random.split(key)
    w = jax.random.normal(kw, (fin, fout), jnp.float32) * (2.0 / fin) ** 0.5
    b = jax.random.normal(kb, (1, fout), jnp.float32) * 0.05
    return {"w": w.astype(jnp.bfloat16), "b": b}


def make_params(key, blocks_num=(1, 1, 1, 1), num_classes=2):
    keys = iter(jax.random.split(key, 64))
    params = {"conv1": _conv_bn_param(next(keys), 7, 3, 64, 2)}
    in_ch = 64
    layers = []
    for li, (ch, nb) in enumerate(zip((64, 128, 256, 512), blocks_num)):
        blocks = []
        for bi in range(nb):
            s = (1 if li == 0 else 2) if bi == 0 else 1
            blk = {"conv1": _conv_bn_param(next(keys), 3, in_ch, ch, s),
                   "conv2": _conv_bn_param(next(keys), 3, ch, ch, 1)}
            if s != 1 or in_ch != ch:
                blk["downsample"] = _conv_bn_param(next(keys), 1, in_ch, ch, s)
            blocks.append(blk)
            in_ch = ch
        layers.append(blocks)
    params["layers"] = layers
    params["fc1"] = _fc_param(next(keys), 512, 1024)
    params["fc2"] = _fc_param(next(keys), 1024, 256)
    params["fc3"] = _fc_param(next(keys), 256, num_classes)
    return params


# --------------------------------------------------------------------------
# Pure-JAX (XLA) reference with matching bf16 matmul inputs / f32 accumulation
# --------------------------------------------------------------------------

def reference_forward(x_nchw, params):
    x = jnp.transpose(x_nchw, (0, 2, 3, 1)).astype(jnp.float32)

    def conv(v, cp, relu, residual=None):
        y = jax.lax.conv_general_dilated(
            v.astype(jnp.bfloat16), cp["w_hwio"],
            window_strides=(cp["stride"], cp["stride"]),
            padding=[(cp["pad"], cp["pad"])] * 2,
            dimension_numbers=("NHWC", "HWIO", "NHWC"),
            preferred_element_type=jnp.float32)
        y = y + cp["b"].reshape(1, 1, 1, -1)
        if residual is not None:
            y = y + residual
        return jnp.maximum(y, 0.0) if relu else y

    x = conv(x, params["conv1"], True)
    x = jax.lax.reduce_window(x, -jnp.inf, jax.lax.max,
                              (1, 3, 3, 1), (1, 2, 2, 1),
                              [(0, 0), (1, 1), (1, 1), (0, 0)])
    for blocks in params["layers"]:
        for blk in blocks:
            identity = x
            if "downsample" in blk:
                identity = conv(x, blk["downsample"], False)
            y = conv(x, blk["conv1"], True)
            x = conv(y, blk["conv2"], True, residual=identity)

    x = jnp.mean(x, axis=(1, 2))

    def fc(h, fp, relu):
        y = jnp.dot(h.astype(jnp.bfloat16), fp["w"],
                    preferred_element_type=jnp.float32) + fp["b"]
        return jnp.maximum(y, 0.0) if relu else y

    x = fc(x, params["fc1"], True)
    x = fc(x, params["fc2"], True)
    return fc(x, params["fc3"], False)


# --------------------------------------------------------------------------

if __name__ == "__main__":
    # Smallest shapes consistent with the module: conv1 requires 3 input
    # channels, and the /32 total downsampling requires spatial >= 32.
    N, C, H, W = 2, 3, 64, 64
    NUM_CLASSES = 2

    key = jax.random.PRNGKey(0)
    kx, kp = jax.random.split(key)
    x = jax.random.normal(kx, (N, C, H, W), jnp.float32)
    params = make_params(kp, blocks_num=(1, 1, 1, 1), num_classes=NUM_CLASSES)

    out = jax.block_until_ready(resnet_forward(x, params))
    assert out.shape == (N, NUM_CLASSES), out.shape

    ref = jax.block_until_ready(reference_forward(x, params))
    err = float(jnp.max(jnp.abs(out - ref)))
    scale = float(jnp.max(jnp.abs(ref))) + 1.0
    assert err <= 3e-2 * scale, f"max abs err {err} vs ref scale {scale}"

    print("KERNEL_OK")
</pallas_src>

<mosaic_0001>
module attributes {stable_mosaic.version = 11 : i64} {
  func.func @_conv_matmul_kernel(%arg0: i32, %arg1: i32, %arg2: memref<1x256x147xbf16, #tpu.memory_space<vmem>>, %arg3: memref<147x64xbf16, #tpu.memory_space<vmem>>, %arg4: memref<1x64xf32, #tpu.memory_space<vmem>>, %arg5: memref<1x256x64xf32, #tpu.memory_space<vmem>>) attributes {dimension_semantics = [#tpu.dimension_semantics<parallel>, #tpu.dimension_semantics<parallel>], iteration_bounds = array<i64: 2, 4>, scalar_prefetch = 0 : i64, scratch_operands = 0 : i64, tpu.core_type = #tpu.core_type<tc>, window_params = [{transform_indices = @transform_0, window_bounds = array<i64: 1, 256, 147>}, {pipeline_mode = #tpu.pipeline_mode<synchronous>, transform_indices = @transform_1, window_bounds = array<i64: 147, 64>}, {pipeline_mode = #tpu.pipeline_mode<synchronous>, transform_indices = @transform_2, window_bounds = array<i64: 1, 64>}, {transform_indices = @transform_3, window_bounds = array<i64: 1, 256, 64>}]} {
    %c0 = arith.constant 0 : index
    %c0_0 = arith.constant 0 : index
    %c0_1 = arith.constant 0 : index
    %0 = vector.load %arg2[%c0, %c0_0, %c0_1] : memref<1x256x147xbf16, #tpu.memory_space<vmem>>, vector<1x256x147xbf16>
    %1 = vector.shape_cast %0 : vector<1x256x147xbf16> to vector<256x147xbf16>
    %c0_2 = arith.constant 0 : index
    %c0_3 = arith.constant 0 : index
    %2 = vector.load %arg3[%c0_2, %c0_3] : memref<147x64xbf16, #tpu.memory_space<vmem>>, vector<147x64xbf16>
    %cst = arith.constant dense<0.000000e+00> : vector<256x64xf32>
    %3 = tpu.matmul %1, %2, %cst {dimension_numbers = #tpu.dot_dimension_numbers<[1], [0], [0], [1], [0, 0, 1, 1], [], []>} : vector<256x147xbf16>, vector<147x64xbf16>, vector<256x64xf32> -> vector<256x64xf32>
    %c0_4 = arith.constant 0 : index
    %c0_5 = arith.constant 0 : index
    %4 = vector.load %arg4[%c0_4, %c0_5] : memref<1x64xf32, #tpu.memory_space<vmem>>, vector<1x64xf32>
    %5 = vector.broadcast %4 : vector<1x64xf32> to vector<256x64xf32>
    %6 = arith.addf %3, %5 : vector<256x64xf32>
    %cst_6 = arith.constant 0.000000e+00 : f32
    %7 = vector.broadcast %cst_6 : f32 to vector<256x64xf32>
    %8 = arith.maximumf %6, %7 : vector<256x64xf32>
    %c0_7 = arith.constant 0 : index
    %c0_8 = arith.constant 0 : index
    %c0_9 = arith.constant 0 : index
    %9 = vector.load %arg5[%c0_7, %c0_8, %c0_9] : memref<1x256x64xf32, #tpu.memory_space<vmem>>, vector<1x256x64xf32>
    %10 = vector.shape_cast %9 : vector<1x256x64xf32> to vector<256x64xf32>
    %11 = vector.shape_cast %8 : vector<256x64xf32> to vector<1x256x64xf32>
    tpu.vector_store %arg5[%c0_7, %c0_8, %c0_9], %11 {strides = array<i32>} : memref<1x256x64xf32, #tpu.memory_space<vmem>>, vector<1x256x64xf32>,
    return
  }
  func.func @transform_0(%arg0: i32, %arg1: i32) -> (i32, i32, i32) {
    %c0_i32 = arith.constant 0 : i32
    %c0_i32_0 = arith.constant 0 : i32
    return %arg0, %arg1, %c0_i32 : i32, i32, i32
  }
  func.func @transform_1(%arg0: i32, %arg1: i32) -> (i32, i32) {
    %c0_i32 = arith.constant 0 : i32
    %c0_i32_0 = arith.constant 0 : i32
    %c0_i32_1 = arith.constant 0 : i32
    return %c0_i32, %c0_i32_0 : i32, i32
  }
  func.func @transform_2(%arg0: i32, %arg1: i32) -> (i32, i32) {
    %c0_i32 = arith.constant 0 : i32
    %c0_i32_0 = arith.constant 0 : i32
    %c0_i32_1 = arith.constant 0 : i32
    return %c0_i32, %c0_i32_0 : i32, i32
  }
  func.func @transform_3(%arg0: i32, %arg1: i32) -> (i32, i32, i32) {
    %c0_i32 = arith.constant 0 : i32
    %c0_i32_0 = arith.constant 0 : i32
    return %arg0, %arg1, %c0_i32 : i32, i32, i32
  }
}

</mosaic_0001>

<llo_original>
// kernel: tpu_custom_call.1
$region0: #{tpu_custom_call.1}
  #allocation0 [shape = 'u32[]', space=smem, size = 0x4, offset = 0x4, fixed_abs, tag = 'smem constant byte address 0x4 - core index']
  #allocation1 [shape = 'u32[72,128]{1,0:T(1,128)}', space=vmem, size = 0x9000, scoped, tag = 'internal scratch']
  %s0 = inlined_call_operand.vmem [shape: bf16[2,1024,147], index: 0, kind: input, shape index: {}]
  %s1 = inlined_call_operand.vmem [shape: bf16[147,64], index: 1, kind: input, shape index: {}]
  %s2 = inlined_call_operand.vmem [shape: f32[1,64], index: 2, kind: input, shape index: {}]
  %s3 = inlined_call_operand.vmem [shape: f32[2,1024,64], index: 3, kind: output, shape index: {}]
  %s4 = sld [smem:[#allocation0]]
  $region45: #{tpu_custom_call.1} parent=0
    _
  %s6 = ssub.s32 1, %s4
  %s7 = scalar_select 0, %s6, %s4
  loop: start=0, step=1, limit=10
  $region2: #{tpu_custom_call.1} parent=0 // loop_pre_header
    _
  $region3: #{tpu_custom_call.1} parent=0 // loop_header
    %s9 = sphi 0, %s13
    %p10 = scmp.ge.s32.totalorder %s9, 10
    %s16 = sphi 0, %s28
    %s17 = sphi 0, %s24
    %s18 = sphi 0, %s16
    %s19 = sphi 0, %s17
    %s20 = sphi 0, %s18
    %s21 = sphi 0, %s19
    %s33 = sphi 0, %s35
    %s36 = sphi 0, %s33
    %s37 = sphi 0, %s36
    %s53 = sphi 0, %s37
    %s57 = sphi 0, %s57
    %s59 = sphi 0, %s57
    %s60 = sphi 0, %s59
    %s74 = sphi 0, %s60
    %s78 = sphi 0, %s78
    %s80 = sphi 0, %s78
    %s81 = sphi 0, %s80
    %s95 = sphi 0, %s81
    %s103 = sphi 0, %s105
    %s106 = sphi 0, %s103
    %s107 = sphi 0, %s106
    %s123 = sphi 0, %s107
  $region4: #{tpu_custom_call.1} parent=0 // loop_header_branch
    %12 = sbr.rel (%p10) target = $region8
  $region5: #{tpu_custom_call.1} parent=0 // loop_body
    %s14 = ssub.s32 %s9, 1
    %s15 = ssub.s32 %s9, 2
    %s22 = sadd.s32 1, %s17
    %p23 = scmp.ge.s32.totalorder %s22, 4
    %s24 = scalar_select %p23, 0, %s22
    %s25 = sadd.s32 1, %s16
    %s26 = scalar_select %p23, %s25, %s16
    %p27 = scmp.ge.s32.totalorder %s26, 2
    %s28 = scalar_select %p27, 0, %s26
    %s29 = ssub.s32 %s16, %s28
    %s30 = ssub.s32 %s17, %s24
    %s31 = sor.u32 %s29, %s30
    %p32 = scmp.eq.s32.totalorder %s31, 0
    %s34 = sadd.s32 %s33, 1
    %s35 = scalar_select %p32, %s33, %s34
    %p38 = pneg %p32
    %p39 = scmp.eq.s32.totalorder %s9, 7
    %p40 = por %p38, %p39
    %p41 = scmp.ne.s32.totalorder %s33, %s36
    %p42 = scmp.eq.s32.totalorder %s9, 0
    %p43 = por %p41, %p42
    %p44 = scmp.ne.s32.totalorder %s33, %s36
    %p45 = scmp.eq.s32.totalorder %s14, 7
    %p46 = por %p44, %p45
    %p47 = scmp.ne.s32.totalorder %s36, %s37
    %p48 = scmp.eq.s32.totalorder %s14, 0
    %p49 = por %p47, %p48
    %p50 = scmp.ne.s32.totalorder %s36, %s37
    %p51 = scmp.eq.s32.totalorder %s15, 7
    %p52 = por %p50, %p51
    %p54 = scmp.ne.s32.totalorder %s37, %s53
    %p55 = scmp.eq.s32.totalorder %s15, 0
    %p56 = por %p54, %p55
    %s58 = sadd.s32 %s57, 1
    %p61 = scmp.eq.s32.totalorder %s9, 7
    %p62 = scmp.ne.s32.totalorder %s57, %s59
    %p63 = scmp.eq.s32.totalorder %s9, 0
    %p64 = por %p62, %p63
    %p65 = scmp.ne.s32.totalorder %s57, %s59
    %p66 = scmp.eq.s32.totalorder %s14, 7
    %p67 = por %p65, %p66
    %p68 = scmp.ne.s32.totalorder %s59, %s60
    %p69 = scmp.eq.s32.totalorder %s14, 0
    %p70 = por %p68, %p69
    %p71 = scmp.ne.s32.totalorder %s59, %s60
    %p72 = scmp.eq.s32.totalorder %s15, 7
    %p73 = por %p71, %p72
    %p75 = scmp.ne.s32.totalorder %s60, %s74
    %p76 = scmp.eq.s32.totalorder %s15, 0
    %p77 = por %p75, %p76
    %s79 = sadd.s32 %s78, 1
    %p82 = scmp.eq.s32.totalorder %s9, 7
    %p83 = scmp.ne.s32.totalorder %s78, %s80
    %p84 = scmp.eq.s32.totalorder %s9, 0
    %p85 = por %p83, %p84
    %p86 = scmp.ne.s32.totalorder %s78, %s80
    %p87 = scmp.eq.s32.totalorder %s14, 7
    %p88 = por %p86, %p87
    %p89 = scmp.ne.s32.totalorder %s80, %s81
    %p90 = scmp.eq.s32.totalorder %s14, 0
    %p91 = por %p89, %p90
    %p92 = scmp.ne.s32.totalorder %s80, %s81
    %p93 = scmp.eq.s32.totalorder %s15, 7
    %p94 = por %p92, %p93
    %p96 = scmp.ne.s32.totalorder %s81, %s95
    %p97 = scmp.eq.s32.totalorder %s15, 0
    %p98 = por %p96, %p97
    %s99 = ssub.s32 %s16, %s28
    %s100 = ssub.s32 %s17, %s24
    %s101 = sor.u32 %s99, %s100
    %p102 = scmp.eq.s32.totalorder %s101, 0
    %s104 = sadd.s32 %s103, 1
    %s105 = scalar_select %p102, %s103, %s104
    %p108 = pneg %p102
    %p109 = scmp.eq.s32.totalorder %s9, 7
    %p110 = por %p108, %p109
    %p111 = scmp.ne.s32.totalorder %s103, %s106
    %p112 = scmp.eq.s32.totalorder %s9, 0
    %p113 = por %p111, %p112
    %p114 = scmp.ne.s32.totalorder %s103, %s106
    %p115 = scmp.eq.s32.totalorder %s14, 7
    %p116 = por %p114, %p115
    %p117 = scmp.ne.s32.totalorder %s106, %s107
    %p118 = scmp.eq.s32.totalorder %s14, 0
    %p119 = por %p117, %p118
    %p120 = scmp.ne.s32.totalorder %s106, %s107
    %p121 = scmp.eq.s32.totalorder %s15, 7
    %p122 = por %p120, %p121
    %p124 = scmp.ne.s32.totalorder %s107, %s123
    %p125 = scmp.eq.s32.totalorder %s15, 0
    %p126 = por %p124, %p125
    %p127 = scmp.le.s32.totalorder 1, %s9
    %p128 = scmp.lt.s32.totalorder %s9, 9
    %p129 = pnand %p127, %p128
    %p130 = pneg %p129
    // Predicated region
    $region9: #{tpu_custom_call.1} parent=5 // pred_check
      _
    $region10: #{tpu_custom_call.1} parent=5 // pred_check_branch
      %132 = sbr.rel (%p129) target = $region12
    $region11: #{tpu_custom_call.1} parent=5 // pred_region
      %s133 = ssub.s32 %s9, 1
      // Predicated region
      $region13: #{tpu_custom_call.1} parent=11 // pred_check
        %p134 = pneg %p70
      $region14: #{tpu_custom_call.1} parent=11 // pred_check_branch
        %136 = sbr.rel (%p134) target = $region16
      $region15: #{tpu_custom_call.1} parent=11 // pred_region
        _
      $region16: #{tpu_custom_call.1} parent=11 // pred_fallthru
        _
      // Predicated region
      $region17: #{tpu_custom_call.1} parent=11 // pred_check
        %p137 = pneg %p91
      $region18: #{tpu_custom_call.1} parent=11 // pred_check_branch
        %139 = sbr.rel (%p137) target = $region20
      $region19: #{tpu_custom_call.1} parent=11 // pred_region
        _
      $region20: #{tpu_custom_call.1} parent=11 // pred_fallthru
        _
    $region12: #{tpu_custom_call.1} parent=5 // pred_fallthru
      _
    %p140 = scmp.lt.s32.totalorder %s9, 8
    // Predicated region
    $region21: #{tpu_custom_call.1} parent=5 // pred_check
      %p141 = pneg %p140
    $region22: #{tpu_custom_call.1} parent=5 // pred_check_branch
      %143 = sbr.rel (%p141) target = $region24
    $region23: #{tpu_custom_call.1} parent=5 // pred_region
      // Predicated region
      $region25: #{tpu_custom_call.1} parent=23 // pred_check
        %p144 = pneg %p43
      $region26: #{tpu_custom_call.1} parent=23 // pred_check_branch
        %146 = sbr.rel (%p144) target = $region28
      $region27: #{tpu_custom_call.1} parent=23 // pred_region
        %s147 = smul.u32 32, %s17
        %p148 = scmp.lt.s32.totalorder %s16, 1
        %s149 = scalar_select %p148, %s16, 1
        %p150 = scmp.lt.s32.totalorder %s147, 127
        %s151 = scalar_select %p150, %s147, 127
        %s152 = smul.addr %s151, 2
        %s153 = smul.addr %s149, 256
        %s154 = sadd.s32 %s152, %s153
        %s155 = smul.addr %s154, 4
        %s156 = scalar_lea.vmem %s0, %s155
        %s157 = smul.u32 32, %s17
      $region28: #{tpu_custom_call.1} parent=23 // pred_fallthru
        _
    $region24: #{tpu_custom_call.1} parent=5 // pred_fallthru
      _
    %p158 = scmp.le.s32.totalorder 1, %s9
    %p159 = scmp.lt.s32.totalorder %s9, 9
    %p160 = pnand %p158, %p159
    %p161 = pneg %p160
    // Predicated region
    $region29: #{tpu_custom_call.1} parent=5 // pred_check
      _
    $region30: #{tpu_custom_call.1} parent=5 // pred_check_branch
      %163 = sbr.rel (%p160) target = $region32
    $region31: #{tpu_custom_call.1} parent=5 // pred_region
      %s164 = ssub.s32 %s9, 1
      %s165 = smul.u32 32, %s19
      %p166 = scmp.lt.s32.totalorder %s18, 1
      %s167 = scalar_select %p166, %s18, 1
      %p168 = scmp.lt.s32.totalorder %s165, 127
      %s169 = scalar_select %p168, %s165, 127
      %s170 = smul.addr %s169, 2
      %s171 = smul.addr %s167, 256
      %s172 = sadd.s32 %s170, %s171
      %s173 = smul.addr %s172, 4
      %s174 = scalar_lea.vmem %s0, %s173
      %p175 = pneg %p49
      %p176 = pneg %p46
      %p177 = pneg %p70
      %p178 = pneg %p67
      %p179 = pneg %p91
      %p180 = pneg %p88
      %p181 = pneg %p119
      %p182 = pneg %p116
      %s183 = smul.u32 32, %s19
      %p184 = scmp.lt.s32.totalorder %s18, 1
      %s185 = scalar_select %p184, %s18, 1
      %p186 = scmp.lt.s32.totalorder %s183, 127
      %s187 = scalar_select %p186, %s183, 127
      %s188 = smul.addr %s185, 128
      %s189 = sadd.s32 %s187, %s188
      %s190 = smul.addr %s189, 8
      %s191 = scalar_lea.vmem %s3, %s190
      %s192 = smul.u32 32, %s19
      %p193 = scmp.lt.s32.totalorder %s18, 1
      %s194 = scalar_select %p193, %s18, 1
      %p195 = scmp.lt.s32.totalorder %s192, 127
      %s196 = scalar_select %p195, %s192, 127
      %s197 = smul.addr %s196, 2
      %s198 = smul.addr %s194, 256
      %s199 = sadd.s32 %s197, %s198
      %s200 = smul.addr %s199, 4
      %s201 = scalar_lea.vmem %s0, %s200
      %s202 = smul.u32 32, %s19
      %s203 = smul.u32 32, %s19
      %p204 = scmp.lt.s32.totalorder %s18, 1
      %s205 = scalar_select %p204, %s18, 1
      %p206 = scmp.lt.s32.totalorder %s203, 127
      %s207 = scalar_select %p206, %s203, 127
      %s208 = smul.addr %s205, 128
      %s209 = sadd.s32 %s207, %s208
      %s210 = smul.addr %s209, 8
      %s211 = scalar_lea.vmem %s3, %s210
      %s212 = smul.u32 32, %s19
      %v214 = vld [vmem:[%s201] sm:$0xff]
      %v215 = vld [vmem:[%s201 + $0x8] sm:$0xff]
      %v216 = vld [vmem:[%s201 + $0x10] sm:$0xff]
      %v217 = vld [vmem:[%s201 + $0x18] sm:$0xff]
      %v218 = vld [vmem:[%s201 + $0x20] sm:$0xff]
      %v219 = vld [vmem:[%s201 + $0x28] sm:$0xff]
      %v220 = vld [vmem:[%s201 + $0x30] sm:$0xff]
      %v221 = vld [vmem:[%s201 + $0x38] sm:$0xff]
      %v222 = vld [vmem:[%s201 + $0x40] sm:$0xff]
      %v223 = vld [vmem:[%s201 + $0x48] sm:$0xff]
      %v224 = vld [vmem:[%s201 + $0x50] sm:$0xff]
      %v225 = vld [vmem:[%s201 + $0x58] sm:$0xff]
      %v226 = vld [vmem:[%s201 + $0x60] sm:$0xff]
      %v227 = vld [vmem:[%s201 + $0x68] sm:$0xff]
      %v228 = vld [vmem:[%s201 + $0x70] sm:$0xff]
      %v229 = vld [vmem:[%s201 + $0x78] sm:$0xff]
      %v230 = vld [vmem:[%s201 + $0x80] sm:$0xff]
      %v231 = vld [vmem:[%s201 + $0x88] sm:$0xff]
      %v232 = vld [vmem:[%s201 + $0x90] sm:$0xff]
      %v233 = vld [vmem:[%s201 + $0x98] sm:$0xff]
      %v234 = vld [vmem:[%s201 + $0xa0] sm:$0xff]
      %v235 = vld [vmem:[%s201 + $0xa8] sm:$0xff]
      %v236 = vld [vmem:[%s201 + $0xb0] sm:$0xff]
      %v237 = vld [vmem:[%s201 + $0xb8] sm:$0xff]
      %v238 = vld [vmem:[%s201 + $0xc0] sm:$0xff]
      %v239 = vld [vmem:[%s201 + $0xc8] sm:$0xff]
      %v240 = vld [vmem:[%s201 + $0xd0] sm:$0xff]
      %v241 = vld [vmem:[%s201 + $0xd8] sm:$0xff]
      %v242 = vld [vmem:[%s201 + $0xe0] sm:$0xff]
      %v243 = vld [vmem:[%s201 + $0xe8] sm:$0xff]
      %v244 = vld [vmem:[%s201 + $0xf0] sm:$0xff]
      %v245 = vld [vmem:[%s201 + $0xf8] sm:$0xff]
      %v246 = vld [vmem:[%s1] sm:$0xf]
      %v247 = vld [vmem:[%s1 + $0x4] sm:$0xf]
      %v248 = vld [vmem:[%s1 + $0x8] sm:$0xf]
      %v249 = vld [vmem:[%s1 + $0xc] sm:$0xf]
      %v250 = vld [vmem:[%s1 + $0x10] sm:$0xf]
      %v251 = vld [vmem:[%s1 + $0x14] sm:$0xf]
      %v252 = vld [vmem:[%s1 + $0x18] sm:$0xf]
      %v253 = vld [vmem:[%s1 + $0x1c] sm:$0xf]
      %v254 = vld [vmem:[%s1 + $0x20] sm:$0xf]
      %v255 = vld [vmem:[%s1 + $0x24] sm:$0xf]
      %v256 = vld [vmem:[%s1 + $0x28] sm:$0xf]
      %v257 = vld [vmem:[%s1 + $0x2c] sm:$0xf]
      %v258 = vld [vmem:[%s1 + $0x30] sm:$0xf]
      %v259 = vld [vmem:[%s1 + $0x34] sm:$0xf]
      %v260 = vld [vmem:[%s1 + $0x38] sm:$0xf]
      %v261 = vld [vmem:[%s1 + $0x3c] sm:$0xf]
      %v262 = vld [vmem:[%s1 + $0x40] sm:$0xf]
      %v263 = vld [vmem:[%s1 + $0x44] sm:$0xf]
      %v264 = vld [vmem:[%s1 + $0x48] sm:$0x3]
      %v265 = vld [vmem:[%s2] sm:$0x1]
      %v267 = vperm.slane %v265, 0
      %v301 = vunpack.c.l.b16 %v214
      %v302 = vunpack.c.h.b16 %v214
      %v303 = vunpack.c.l.b16 %v215
      %v304 = vunpack.c.h.b16 %v215
      %v305 = vunpack.c.l.b16 %v216
      %v306 = vunpack.c.h.b16 %v216
      %v307 = vunpack.c.l.b16 %v217
      %v308 = vunpack.c.h.b16 %v217
      %v309 = vunpack.c.l.b16 %v218
      %v310 = vunpack.c.h.b16 %v218
      %v311 = vunpack.c.l.b16 %v219
      %v312 = vunpack.c.h.b16 %v219
      %v313 = vunpack.c.l.b16 %v220
      %v314 = vunpack.c.h.b16 %v220
      %v315 = vunpack.c.l.b16 %v221
      %v316 = vunpack.c.h.b16 %v221
      %v317 = vunpack.c.l.b16 %v222
      %v318 = vunpack.c.h.b16 %v222
      %v319 = vunpack.c.l.b16 %v223
      %v320 = vunpack.c.h.b16 %v223
      %v321 = vunpack.c.l.b16 %v224
      %v322 = vunpack.c.h.b16 %v224
      %v323 = vunpack.c.l.b16 %v225
      %v324 = vunpack.c.h.b16 %v225
      %v325 = vunpack.c.l.b16 %v226
      %v326 = vunpack.c.h.b16 %v226
      %v327 = vunpack.c.l.b16 %v227
      %v328 = vunpack.c.h.b16 %v227
      %v329 = vunpack.c.l.b16 %v228
      %v330 = vunpack.c.h.b16 %v228
      %v331 = vunpack.c.l.b16 %v229
      %v332 = vunpack.c.h.b16 %v229
      %v333 = vunpack.c.l.b16 %v230
      %v334 = vunpack.c.h.b16 %v230
      %v335 = vunpack.c.l.b16 %v231
      %v336 = vunpack.c.h.b16 %v231
      %v337 = vunpack.c.l.b16 %v232
      %v338 = vunpack.c.h.b16 %v232
      %v339 = vunpack.c.l.b16 %v233
      %v340 = vunpack.c.h.b16 %v233
      %v341 = vunpack.c.l.b16 %v234
      %v342 = vunpack.c.h.b16 %v234
      %v343 = vunpack.c.l.b16 %v235
      %v344 = vunpack.c.h.b16 %v235
      %v345 = vunpack.c.l.b16 %v236
      %v346 = vunpack.c.h.b16 %v236
      %v347 = vunpack.c.l.b16 %v237
      %v348 = vunpack.c.h.b16 %v237
      %v349 = vunpack.c.l.b16 %v238
      %v350 = vunpack.c.h.b16 %v238
      %v351 = vunpack.c.l.b16 %v239
      %v352 = vunpack.c.h.b16 %v239
      %v353 = vunpack.c.l.b16 %v240
      %v354 = vunpack.c.h.b16 %v240
      %v355 = vunpack.c.l.b16 %v241
      %v356 = vunpack.c.h.b16 %v241
      %v357 = vunpack.c.l.b16 %v242
      %v358 = vunpack.c.h.b16 %v242
      %v359 = vunpack.c.l.b16 %v243
      %v360 = vunpack.c.h.b16 %v243
      %v361 = vunpack.c.l.b16 %v244
      %v362 = vunpack.c.h.b16 %v244
      %v363 = vunpack.c.l.b16 %v245
      %v364 = vunpack.c.h.b16 %v245
      %v365 = vpack.c.b16 %v303, %v301
      %v366 = vpack.c.b16 %v304, %v302
      %v367 = vpack.c.b16 %v307, %v305
      %v368 = vpack.c.b16 %v308, %v306
      %v369 = vpack.c.b16 %v311, %v309
      %v370 = vpack.c.b16 %v312, %v310
      %v371 = vpack.c.b16 %v315, %v313
      %v372 = vpack.c.b16 %v316, %v314
      %v373 = vpack.c.b16 %v319, %v317
      %v374 = vpack.c.b16 %v320, %v318
      %v375 = vpack.c.b16 %v323, %v321
      %v376 = vpack.c.b16 %v324, %v322
      %v377 = vpack.c.b16 %v327, %v325
      %v378 = vpack.c.b16 %v328, %v326
      %v379 = vpack.c.b16 %v331, %v329
      %v380 = vpack.c.b16 %v332, %v330
      %v381 = vpack.c.b16 %v335, %v333
      %v382 = vpack.c.b16 %v336, %v334
      %v383 = vpack.c.b16 %v339, %v337
      %v384 = vpack.c.b16 %v340, %v338
      %v385 = vpack.c.b16 %v343, %v341
      %v386 = vpack.c.b16 %v344, %v342
      %v387 = vpack.c.b16 %v347, %v345
      %v388 = vpack.c.b16 %v348, %v346
      %v389 = vpack.c.b16 %v351, %v349
      %v390 = vpack.c.b16 %v352, %v350
      %v391 = vpack.c.b16 %v355, %v353
      %v392 = vpack.c.b16 %v356, %v354
      %v393 = vpack.c.b16 %v359, %v357
      %v394 = vpack.c.b16 %v360, %v358
      %v395 = vpack.c.b16 %v363, %v361
      %v396 = vpack.c.b16 %v364, %v362
      %v432 = vunpack.c.l.b16 %v246
      %v433 = vunpack.c.l.b16 %v247
      %v434 = vunpack.c.l.b16 %v248
      %v435 = vunpack.c.l.b16 %v249
      %v436 = vunpack.c.l.b16 %v250
      %v437 = vunpack.c.l.b16 %v251
      %v438 = vunpack.c.l.b16 %v252
      %v439 = vunpack.c.l.b16 %v253
      %v440 = vunpack.c.l.b16 %v254
      %v441 = vunpack.c.l.b16 %v255
      %v442 = vunpack.c.l.b16 %v256
      %v443 = vunpack.c.l.b16 %v257
      %v444 = vunpack.c.l.b16 %v258
      %v445 = vunpack.c.l.b16 %v259
      %v446 = vunpack.c.l.b16 %v260
      %v447 = vunpack.c.l.b16 %v261
      %v448 = vunpack.c.l.b16 %v262
      %v449 = vunpack.c.l.b16 %v263
      %v450 = vunpack.c.l.b16 %v264
      %v451 = vpack.c.b16 %v433, %v432
      %v452 = vpack.c.b16 %v435, %v434
      %v453 = vpack.c.b16 %v437, %v436
      %v454 = vpack.c.b16 %v439, %v438
      %v455 = vpack.c.b16 %v441, %v440
      %v456 = vpack.c.b16 %v443, %v442
      %v457 = vpack.c.b16 %v445, %v444
      %v458 = vpack.c.b16 %v447, %v446
      %v459 = vpack.c.b16 %v449, %v448
      %v460 = vpack.c.b16 %v450, %v450
      %vm470 = vcmask 154624
      %v472 = vsel %vm470, %v366, 0
      %v475 = vsel %vm470, %v368, 0
      %v478 = vsel %vm470, %v370, 0
      %v481 = vsel %vm470, %v372, 0
      %v484 = vsel %vm470, %v374, 0
      %v487 = vsel %vm470, %v376, 0
      %v490 = vsel %vm470, %v378, 0
      %v493 = vsel %vm470, %v380, 0
      %v496 = vsel %vm470, %v382, 0
      %v499 = vsel %vm470, %v384, 0
      %v502 = vsel %vm470, %v386, 0
      %v505 = vsel %vm470, %v388, 0
      %v508 = vsel %vm470, %v390, 0
      %v511 = vsel %vm470, %v392, 0
      %v514 = vsel %vm470, %v394, 0
      %v517 = vsel %vm470, %v396, 0
      %vm519 = vcmask 1040384
      %vm520 = vcmask 1041408
      %v521 = vsel %vm519, 4294967295, 65535
      %v522 = vsel %vm520, %v521, 0
      %v524 = vand.u32 %v460, %v522
      %526 = vmatpush.bf16.msra.mxu0 %v458
      %527 = vmatpush.bf16.msra.mxu0 %v457
      %528 = vmatpush.bf16.msra.mxu0 %v456
      %529 = vmatpush.bf16.msra.mxu0 %v455
      %530 = vmatpush.bf16.msra.mxu0 %v454
      %531 = vmatpush.bf16.msra.mxu0 %v453
      %532 = vmatpush.bf16.msra.mxu0 %v452
      %533 = vmatpush.bf16.msra.mxu0 %v451
      %534 = vmatmul.bf16.gmra.mxu0 %v365
      %v535 = vpop.f32.mrf.mxu0
      %v536 = vadd.f32 %v267, %v535
      %v537 = vpop.f32.mrf.mxu0
      %v538 = vadd.f32 %v267, %v537
      %539 = vmatmul.bf16.gmra.mxu0 %v367
      %v540 = vpop.f32.mrf.mxu0
      %v541 = vadd.f32 %v267, %v540
      %v542 = vpop.f32.mrf.mxu0
      %v543 = vadd.f32 %v267, %v542
      %544 = vmatmul.bf16.gmra.mxu0 %v369
      %v545 = vpop.f32.mrf.mxu0
      %v546 = vadd.f32 %v267, %v545
      %v547 = vpop.f32.mrf.mxu0
      %v548 = vadd.f32 %v267, %v547
      %549 = vmatmul.bf16.gmra.mxu0 %v371
      %v550 = vpop.f32.mrf.mxu0
      %v551 = vadd.f32 %v267, %v550
      %v552 = vpop.f32.mrf.mxu0
      %v553 = vadd.f32 %v267, %v552
      %554 = vmatmul.bf16.gmra.mxu0 %v373
      %v555 = vpop.f32.mrf.mxu0
      %v556 = vadd.f32 %v267, %v555
      %v557 = vpop.f32.mrf.mxu0
      %v558 = vadd.f32 %v267, %v557
      %559 = vmatmul.bf16.gmra.mxu0 %v375
      %v560 = vpop.f32.mrf.mxu0
      %v561 = vadd.f32 %v267, %v560
      %v562 = vpop.f32.mrf.mxu0
      %v563 = vadd.f32 %v267, %v562
      %564 = vmatmul.bf16.gmra.mxu0 %v377
      %v565 = vpop.f32.mrf.mxu0
      %v566 = vadd.f32 %v267, %v565
      %v567 = vpop.f32.mrf.mxu0
      %v568 = vadd.f32 %v267, %v567
      %569 = vmatmul.bf16.gmra.mxu0 %v379
      %v570 = vpop.f32.mrf.mxu0
      %v571 = vadd.f32 %v267, %v570
      %v572 = vpop.f32.mrf.mxu0
      %v573 = vadd.f32 %v267, %v572
      %574 = vmatmul.bf16.gmra.mxu0 %v381
      %v575 = vpop.f32.mrf.mxu0
      %v576 = vadd.f32 %v267, %v575
      %v577 = vpop.f32.mrf.mxu0
      %v578 = vadd.f32 %v267, %v577
      %579 = vmatmul.bf16.gmra.mxu0 %v383
      %v580 = vpop.f32.mrf.mxu0
      %v581 = vadd.f32 %v267, %v580
      %v582 = vpop.f32.mrf.mxu0
      %v583 = vadd.f32 %v267, %v582
      %584 = vmatmul.bf16.gmra.mxu0 %v385
      %v585 = vpop.f32.mrf.mxu0
      %v586 = vadd.f32 %v267, %v585
      %v587 = vpop.f32.mrf.mxu0
      %v588 = vadd.f32 %v267, %v587
      %589 = vmatmul.bf16.gmra.mxu0 %v387
      %v590 = vpop.f32.mrf.mxu0
      %v591 = vadd.f32 %v267, %v590
      %v592 = vpop.f32.mrf.mxu0
      %v593 = vadd.f32 %v267, %v592
      %594 = vmatmul.bf16.gmra.mxu0 %v389
      %v595 = vpop.f32.mrf.mxu0
      %v596 = vadd.f32 %v267, %v595
      %v597 = vpop.f32.mrf.mxu0
      %v598 = vadd.f32 %v267, %v597
      %599 = vmatmul.bf16.gmra.mxu0 %v391
      %v600 = vpop.f32.mrf.mxu0
      %v601 = vadd.f32 %v267, %v600
      %v602 = vpop.f32.mrf.mxu0
      %v603 = vadd.f32 %v267, %v602
      %604 = vmatmul.bf16.gmra.mxu0 %v393
      %v605 = vpop.f32.mrf.mxu0
      %v606 = vadd.f32 %v267, %v605
      %v607 = vpop.f32.mrf.mxu0
      %v608 = vadd.f32 %v267, %v607
      %609 = vmatmul.bf16.gmra.mxu0 %v395
      %v610 = vpop.f32.mrf.mxu0
      %v611 = vadd.f32 %v267, %v610
      %v612 = vpop.f32.mrf.mxu0
      %v613 = vadd.f32 %v267, %v612
      %614 = vdwg.mxu0
      %615 = vmatpush.bf16.msra.mxu0 0
      %616 = vmatpush.bf16.msra.mxu0 0
      %617 = vmatpush.bf16.msra.mxu0 0
      %618 = vmatpush.bf16.msra.mxu0 0
      %619 = vmatpush.bf16.msra.mxu0 0
      %620 = vmatpush.bf16.msra.mxu0 0
      %621 = vmatpush.bf16.msra.mxu0 %v524
      %622 = vmatpush.bf16.msra.mxu0 %v459
      %623 = vmatmul.bf16.gmra.mxu0 %v472
      %v624 = vpop.f32.mrf.mxu0
      %v625 = vadd.f32 %v536, %v624
      %v626 = vpop.f32.mrf.mxu0
      %v627 = vadd.f32 %v538, %v626
      %628 = vmatmul.bf16.gmra.mxu0 %v475
      %v629 = vpop.f32.mrf.mxu0
      %v630 = vadd.f32 %v541, %v629
      %v631 = vpop.f32.mrf.mxu0
      %v632 = vadd.f32 %v543, %v631
      %633 = vmatmul.bf16.gmra.mxu0 %v478
      %v634 = vpop.f32.mrf.mxu0
      %v635 = vadd.f32 %v546, %v634
      %v636 = vpop.f32.mrf.mxu0
      %v637 = vadd.f32 %v548, %v636
      %638 = vmatmul.bf16.gmra.mxu0 %v481
      %v639 = vpop.f32.mrf.mxu0
      %v640 = vadd.f32 %v551, %v639
      %v641 = vpop.f32.mrf.mxu0
      %v642 = vadd.f32 %v553, %v641
      %643 = vmatmul.bf16.gmra.mxu0 %v484
      %v644 = vpop.f32.mrf.mxu0
      %v645 = vadd.f32 %v556, %v644
      %v646 = vpop.f32.mrf.mxu0
      %v647 = vadd.f32 %v558, %v646
      %648 = vmatmul.bf16.gmra.mxu0 %v487
      %v649 = vpop.f32.mrf.mxu0
      %v650 = vadd.f32 %v561, %v649
      %v651 = vpop.f32.mrf.mxu0
      %v652 = vadd.f32 %v563, %v651
      %653 = vmatmul.bf16.gmra.mxu0 %v490
      %v654 = vpop.f32.mrf.mxu0
      %v655 = vadd.f32 %v566, %v654
      %v656 = vpop.f32.mrf.mxu0
      %v657 = vadd.f32 %v568, %v656
      %658 = vmatmul.bf16.gmra.mxu0 %v493
      %v659 = vpop.f32.mrf.mxu0
      %v660 = vadd.f32 %v571, %v659
      %v661 = vpop.f32.mrf.mxu0
      %v662 = vadd.f32 %v573, %v661
      %663 = vmatmul.bf16.gmra.mxu0 %v496
      %v664 = vpop.f32.mrf.mxu0
      %v665 = vadd.f32 %v576, %v664
      %v666 = vpop.f32.mrf.mxu0
      %v667 = vadd.f32 %v578, %v666
      %668 = vmatmul.bf16.gmra.mxu0 %v499
      %v669 = vpop.f32.mrf.mxu0
      %v670 = vadd.f32 %v581, %v669
      %v671 = vpop.f32.mrf.mxu0
      %v672 = vadd.f32 %v583, %v671
      %673 = vmatmul.bf16.gmra.mxu0 %v502
      %v674 = vpop.f32.mrf.mxu0
      %v675 = vadd.f32 %v586, %v674
      %v676 = vpop.f32.mrf.mxu0
      %v677 = vadd.f32 %v588, %v676
      %678 = vmatmul.bf16.gmra.mxu0 %v505
      %v679 = vpop.f32.mrf.mxu0
      %v680 = vadd.f32 %v591, %v679
      %v681 = vpop.f32.mrf.mxu0
      %v682 = vadd.f32 %v593, %v681
      %683 = vmatmul.bf16.gmra.mxu0 %v508
      %v684 = vpop.f32.mrf.mxu0
      %v685 = vadd.f32 %v596, %v684
      %v686 = vpop.f32.mrf.mxu0
      %v687 = vadd.f32 %v598, %v686
      %688 = vmatmul.bf16.gmra.mxu0 %v511
      %v689 = vpop.f32.mrf.mxu0
      %v690 = vadd.f32 %v601, %v689
      %v691 = vpop.f32.mrf.mxu0
      %v692 = vadd.f32 %v603, %v691
      %693 = vmatmul.bf16.gmra.mxu0 %v514
      %v694 = vpop.f32.mrf.mxu0
      %v695 = vadd.f32 %v606, %v694
      %v696 = vpop.f32.mrf.mxu0
      %v697 = vadd.f32 %v608, %v696
      %698 = vmatmul.bf16.gmra.mxu0 %v517
      %v699 = vpop.f32.mrf.mxu0
      %v700 = vadd.f32 %v611, %v699
      %v701 = vpop.f32.mrf.mxu0
      %v702 = vadd.f32 %v613, %v701
      %703 = vdwg.mxu0
      %v704 = vmax.f32 %v625, 0.0
      %v705 = vmax.f32 %v627, 0.0
      %v706 = vmax.f32 %v630, 0.0
      %v707 = vmax.f32 %v632, 0.0
      %v708 = vmax.f32 %v635, 0.0
      %v709 = vmax.f32 %v637, 0.0
      %v710 = vmax.f32 %v640, 0.0
      %v711 = vmax.f32 %v642, 0.0
      %v712 = vmax.f32 %v645, 0.0
      %v713 = vmax.f32 %v647, 0.0
      %v714 = vmax.f32 %v650, 0.0
      %v715 = vmax.f32 %v652, 0.0
      %v716 = vmax.f32 %v655, 0.0
      %v717 = vmax.f32 %v657, 0.0
      %v718 = vmax.f32 %v660, 0.0
      %v719 = vmax.f32 %v662, 0.0
      %v720 = vmax.f32 %v665, 0.0
      %v721 = vmax.f32 %v667, 0.0
      %v722 = vmax.f32 %v670, 0.0
      %v723 = vmax.f32 %v672, 0.0
      %v724 = vmax.f32 %v675, 0.0
      %v725 = vmax.f32 %v677, 0.0
      %v726 = vmax.f32 %v680, 0.0
      %v727 = vmax.f32 %v682, 0.0
      %v728 = vmax.f32 %v685, 0.0
      %v729 = vmax.f32 %v687, 0.0
      %v730 = vmax.f32 %v690, 0.0
      %v731 = vmax.f32 %v692, 0.0
      %v732 = vmax.f32 %v695, 0.0
      %v733 = vmax.f32 %v697, 0.0
      %v734 = vmax.f32 %v700, 0.0
      %v735 = vmax.f32 %v702, 0.0
      %vm736 = vcmask 523264
      %737 = vst.msk [vmem:[%s211] sm:$0xff] %vm736, %v704
      %738 = vst.msk [vmem:[%s211 + $0x8] sm:$0xff] %vm736, %v705
      %739 = vst.msk [vmem:[%s211 + $0x10] sm:$0xff] %vm736, %v706
      %740 = vst.msk [vmem:[%s211 + $0x18] sm:$0xff] %vm736, %v707
      %741 = vst.msk [vmem:[%s211 + $0x20] sm:$0xff] %vm736, %v708
      %742 = vst.msk [vmem:[%s211 + $0x28] sm:$0xff] %vm736, %v709
      %743 = vst.msk [vmem:[%s211 + $0x30] sm:$0xff] %vm736, %v710
      %744 = vst.msk [vmem:[%s211 + $0x38] sm:$0xff] %vm736, %v711
      %745 = vst.msk [vmem:[%s211 + $0x40] sm:$0xff] %vm736, %v712
      %746 = vst.msk [vmem:[%s211 + $0x48] sm:$0xff] %vm736, %v713
      %747 = vst.msk [vmem:[%s211 + $0x50] sm:$0xff] %vm736, %v714
      %748 = vst.msk [vmem:[%s211 + $0x58] sm:$0xff] %vm736, %v715
      %749 = vst.msk [vmem:[%s211 + $0x60] sm:$0xff] %vm736, %v716
      %750 = vst.msk [vmem:[%s211 + $0x68] sm:$0xff] %vm736, %v717
      %751 = vst.msk [vmem:[%s211 + $0x70] sm:$0xff] %vm736, %v718
      %752 = vst.msk [vmem:[%s211 + $0x78] sm:$0xff] %vm736, %v719
      %753 = vst.msk [vmem:[%s211 + $0x80] sm:$0xff] %vm736, %v720
      %754 = vst.msk [vmem:[%s211 + $0x88] sm:$0xff] %vm736, %v721
      %755 = vst.msk [vmem:[%s211 + $0x90] sm:$0xff] %vm736, %v722
      %756 = vst.msk [vmem:[%s211 + $0x98] sm:$0xff] %vm736, %v723
      %757 = vst.msk [vmem:[%s211 + $0xa0] sm:$0xff] %vm736, %v724
      %758 = vst.msk [vmem:[%s211 + $0xa8] sm:$0xff] %vm736, %v725
      %759 = vst.msk [vmem:[%s211 + $0xb0] sm:$0xff] %vm736, %v726
      %760 = vst.msk [vmem:[%s211 + $0xb8] sm:$0xff] %vm736, %v727
      %761 = vst.msk [vmem:[%s211 + $0xc0] sm:$0xff] %vm736, %v728
      %762 = vst.msk [vmem:[%s211 + $0xc8] sm:$0xff] %vm736, %v729
      %763 = vst.msk [vmem:[%s211 + $0xd0] sm:$0xff] %vm736, %v730
      %764 = vst.msk [vmem:[%s211 + $0xd8] sm:$0xff] %vm736, %v731
      %765 = vst.msk [vmem:[%s211 + $0xe0] sm:$0xff] %vm736, %v732
      %766 = vst.msk [vmem:[%s211 + $0xe8] sm:$0xff] %vm736, %v733
      %767 = vst.msk [vmem:[%s211 + $0xf0] sm:$0xff] %vm736, %v734
      %768 = vst.msk [vmem:[%s211 + $0xf8] sm:$0xff] %vm736, %v735
      %s769 = smul.u32 32, %s19
      %p770 = scmp.lt.s32.totalorder %s18, 1
      %s771 = scalar_select %p770, %s18, 1
      %p772 = scmp.lt.s32.totalorder %s769, 127
      %s773 = scalar_select %p772, %s769, 127
      %s774 = smul.addr %s771, 128
      %s775 = sadd.s32 %s773, %s774
      %s776 = smul.addr %s775, 8
      %s777 = scalar_lea.vmem %s3, %s776
      // Predicated region
      $region33: #{tpu_custom_call.1} parent=31 // pred_check
        %p778 = pneg %p116
      $region34: #{tpu_custom_call.1} parent=31 // pred_check_branch
        %780 = sbr.rel (%p778) target = $region36
      $region35: #{tpu_custom_call.1} parent=31 // pred_region
        %s781 = smul.u32 32, %s19
      $region36: #{tpu_custom_call.1} parent=31 // pred_fallthru
        _
    $region32: #{tpu_custom_call.1} parent=5 // pred_fallthru
      _
    %p782 = scmp.le.s32.totalorder 2, %s9
    // Predicated region
    $region37: #{tpu_custom_call.1} parent=5 // pred_check
      %p783 = pneg %p782
    $region38: #{tpu_custom_call.1} parent=5 // pred_check_branch
      %785 = sbr.rel (%p783) target = $region40
    $region39: #{tpu_custom_call.1} parent=5 // pred_region
      %s786 = ssub.s32 %s9, 2
      // Predicated region
      $region41: #{tpu_custom_call.1} parent=39 // pred_check
        %p787 = pneg %p122
      $region42: #{tpu_custom_call.1} parent=39 // pred_check_branch
        %789 = sbr.rel (%p787) target = $region44
      $region43: #{tpu_custom_call.1} parent=39 // pred_region
        %s790 = smul.u32 32, %s21
        %p791 = scmp.lt.s32.totalorder %s20, 1
        %s792 = scalar_select %p791, %s20, 1
        %p793 = scmp.lt.s32.totalorder %s790, 127
        %s794 = scalar_select %p793, %s790, 127
        %s795 = smul.addr %s792, 128
        %s796 = sadd.s32 %s794, %s795
        %s797 = smul.addr %s796, 8
        %s798 = scalar_lea.vmem %s3, %s797
      $region44: #{tpu_custom_call.1} parent=39 // pred_fallthru
        _
    $region40: #{tpu_custom_call.1} parent=5 // pred_fallthru
      _
  $region6: #{tpu_custom_call.1} parent=0 // loop_footer
    %s13 = sadd.s32 1, %s9
  $region7: #{tpu_custom_call.1} parent=0 // loop_footer_branch
    %8 = sbr.rel target = $region3
  $region8: #{tpu_custom_call.1} parent=0 // loop_exit
    _

</llo_original>
